<compile_context>
chip_gen: v7x
topology: tpu7x:2x2x1
jax: 0.10.0
libtpu: 0.0.40
codegen_flags: <defaults>
</compile_context>

<pallas_src>
import functools

import numpy as np
import jax
import jax.numpy as jnp
from jax.experimental import pallas as pl
from jax.experimental.pallas import tpu as pltpu


@functools.lru_cache(maxsize=None)
def _roll_matches_jnp():
    """One-time probe of pltpu.roll's rotate direction.

    Returns True if pltpu.roll(x, s, axis) == jnp.roll(x, s, axis), i.e.
    result[i] = x[(i - s) % N].  Keeps the conv-tap shifts robust across
    Pallas/Mosaic versions.
    """
    def kernel(x_ref, o_ref):
        o_ref[...] = pltpu.roll(x_ref[...], 1, axis=0)

    x = jnp.zeros((8, 128), jnp.float32).at[0, 0].set(1.0)
    r = pl.pallas_call(
        kernel, out_shape=jax.ShapeDtypeStruct((8, 128), jnp.float32))(x)
    return bool(r[1, 0] > 0.5)


# Warm the probe eagerly at import time: later calls (possibly inside jax.jit)
# only read the cached concrete bool.
_ROLL_FWD = _roll_matches_jnp()


def _tensorcores_per_chip():
    """1 on single-TC chips (v5e/v6e), 2 on dual-TC chips (v7x, v4/v5p megacore)."""
    try:
        kind = jax.devices()[0].device_kind.lower()
    except Exception:
        return 1
    if ("v7" in kind) or ("7x" in kind) or ("v4" in kind) or ("v5p" in kind):
        return 2
    return 1


def _conv3x3_masks(H, W, Bb, GW):
    """(9, Bb*H*W, GW) f32 boundary-validity masks for the nine 3x3 taps.

    Built with numpy at trace time (H, W, Bb are Python ints) so the kernel
    loads them as cheap VMEM constants instead of running iota / div / mod.
    """
    HW = H * W
    M = Bb * HW
    pos = np.arange(M) % HW
    yy = pos // W
    xx = pos % W
    mask = np.zeros((9, M, GW), np.float32)
    t = 0
    for dy in (-1, 0, 1):
        for dx in (-1, 0, 1):
            valid = ((yy + dy >= 0) & (yy + dy < H) &
                     (xx + dx >= 0) & (xx + dx < W))
            mask[t] = valid[:, None].astype(np.float32)
            t += 1
    return jnp.asarray(mask)


def _resnext_se_kernel(H, W, Bb, roll_fwd,
                       x_ref, mask_ref,
                       w1d_ref, s1d_ref, b1d_ref,
                       w2_ref, s2_ref, b2_ref,
                       w3_ref, s3_ref, b3_ref,
                       wse1_ref, wse2_ref,
                       o_ref):
    """One batch block per grid step; rows = Bb*H*W stacked images, channels last."""
    HW = H * W
    M = Bb * HW
    GW = w2_ref.shape[1]
    Cout = w3_ref.shape[1]
    Cmid = wse1_ref.shape[0]

    x = x_ref[...]                                                     # (M, Cin) bf16

    # ---- conv1 (1x1) + downsample (1x1): shared LHS -> ONE fused MXU matmul
    #      with N = GW + Cout; both BatchNorms folded into one scale/bias. -----
    h = jnp.dot(x, w1d_ref[...], preferred_element_type=jnp.float32)   # (M, GW+Cout)
    h = h * s1d_ref[...] + b1d_ref[...]
    h1 = jnp.maximum(h[:, :GW], 0.0)                                   # conv1+bn1+relu
    idn = h[:, GW:]                                                    # downsample+bn

    # ---- conv2: grouped 3x3, padding=1 (block-diagonal dense weight) as ONE
    #      fused im2col matmul with K = 9*GW.  The 9 shifted taps stay in
    #      registers (pltpu.roll along the row/sublane axis); boundary masks are
    #      trace-time constants loaded from VMEM; each masked tap goes to bf16
    #      before the lane concat so only half the vreg bytes stay live.  Any
    #      tap wrapping across an image (or batch) boundary is zeroed by its mask.
    taps = []
    t = 0
    for dy in (-1, 0, 1):
        for dx in (-1, 0, 1):
            off = dy * W + dx                     # row shift in flattened (H*W)
            if off == 0:
                taps.append(h1.astype(jnp.bfloat16))
            else:
                shift = (-off) % M if roll_fwd else off % M
                tap = pltpu.roll(h1, shift, axis=0)
                taps.append((tap * mask_ref[t]).astype(jnp.bfloat16))
            t += 1
    im2col = jnp.concatenate(taps, axis=1)                             # (M, 9*GW) bf16
    h2 = jnp.dot(im2col, w2_ref[...], preferred_element_type=jnp.float32)
    h2 = jnp.maximum(h2 * s2_ref[...] + b2_ref[...], 0.0)              # (M, GW)

    # ---- conv3 (1x1) + bn3 ----------------------------------------------------
    h3 = jnp.dot(h2.astype(jnp.bfloat16), w3_ref[...],
                 preferred_element_type=jnp.float32)
    h3 = h3 * s3_ref[...] + b3_ref[...]                                # (M, Cout)

    # ---- SE: per-image global avg pool -> fc1 -> relu -> fc2 -> sigmoid ------
    # fc1/fc2 are 1-2 row matmuls on the serial tail; an MXU push+drain there is
    # pure latency, so evaluate them on the VPU/XLU, unrolled over the tiny SE
    # hidden width (weights are (Cmid, Cout), f32).
    h3_img = h3.reshape(Bb, HW, Cout)
    y = jnp.mean(h3_img, axis=1)                                       # (Bb, Cout)
    acc = None
    for r in range(Cmid):
        yr = jnp.maximum(
            jnp.sum(y * wse1_ref[r:r + 1, :], axis=1, keepdims=True), 0.0)  # (Bb, 1)
        term = yr * wse2_ref[r:r + 1, :]                                     # (Bb, Cout)
        acc = term if acc is None else acc + term
    gate = jax.nn.sigmoid(acc)                                          # (Bb, Cout)
    out = (h3_img * gate[:, None, :]).reshape(M, Cout)

    # ---- stochastic depth (identity in eval) + residual add + relu -----------
    out = jnp.maximum(out + idn, 0.0)

    # ---- lane-dense store: pack (M, Cout) -> (Bb*H, W*Cout) with W static
    #      lane-offset stores (vst slot) instead of an XLU lane concat.
    #      W*Cout = 128 at demo shapes -> dense output DMA.
    out3 = out.reshape(Bb * H, W, Cout)
    for xi in range(W):
        o_ref[:, xi * Cout:(xi + 1) * Cout] = out3[:, xi, :]


def resnext_block_se(x_nchw, params, *, batch_blocks=None):
    """Eval-mode ResNeXt+SE block.  x_nchw: (B, Cin, H, W) f32 -> (B, Cout, H, W) f32.

    params = (w1, s1, b1, w2, s2, b2, w3, s3, b3, wd, sd, bd, wse1, wse2):
    1x1 conv weights as (Cin, Cout) matrices, grouped 3x3 conv as block-diagonal
    dense (3, 3, GW, GW), BatchNorms folded to (1, C) scale / bias, SE linears as
    (Cout, Cmid) / (Cmid, Cout).
    """
    (w1, s1, b1, w2, s2, b2, w3, s3, b3, wd, sd, bd, wse1, wse2) = params
    B, Cin, H, W = x_nchw.shape
    GW = w1.shape[1]
    Cout = w3.shape[1]
    HW = H * W

    if batch_blocks is None:
        # Single-TC chips (v5e/v6e): the grid is a serial loop, so fold the whole
        # batch into one M = B*H*W matmul (fills MXU rows, no per-step overhead).
        # Dual-TC chips (v7x): a 2-step "parallel" batch axis feeds both cores.
        ntc = _tensorcores_per_chip()
        batch_blocks = ntc if (ntc > 1 and B % ntc == 0) else 1
    assert B % batch_blocks == 0
    Bb = B // batch_blocks
    M = Bb * HW

    # TODO(synk): for real ResNeXt widths (H=W>=28, GW>=128) add an M(row)-tiling
    # grid axis in whole-image multiples and budget VMEM per generation (64 MiB
    # on v7x vs 128 MiB on v5e/v6e); the whole-block-resident scheme is demo-sized.
    # TODO(synk): the NCHW<->channels-last transposes below add one extra HBM
    # read+write of the activation per block; keep activations in the lane-dense
    # (B*H, W*C) slab between blocks in a real multi-block pipeline.
    x = jnp.transpose(x_nchw, (0, 2, 3, 1)).reshape(B * HW, Cin).astype(jnp.bfloat16)

    bf = lambda a: a.astype(jnp.bfloat16)
    f32 = lambda a: a.astype(jnp.float32)

    # conv1 + downsample fused along N; their BNs folded into one scale/bias.
    w1d = bf(jnp.concatenate([w1, wd], axis=1))          # (Cin, GW+Cout)
    s1d = f32(jnp.concatenate([s1, sd], axis=1))         # (1, GW+Cout)
    b1d = f32(jnp.concatenate([b1, bd], axis=1))

    mask = _conv3x3_masks(H, W, Bb, GW)                  # (9, M, GW) f32 constants

    kparams = (mask,
               w1d, s1d, b1d,
               bf(w2.reshape(9 * GW, GW)), f32(s2), f32(b2),   # im2col weight layout
               bf(w3), f32(s3), f32(b3),
               f32(jnp.transpose(wse1)), f32(wse2))            # SE weights (Cmid, Cout)

    def full_spec(a):
        nd = a.ndim
        return pl.BlockSpec(a.shape, lambda i, _nd=nd: (0,) * _nd)

    kernel = functools.partial(_resnext_se_kernel, H, W, Bb, _ROLL_FWD)

    out = pl.pallas_call(
        kernel,
        out_shape=jax.ShapeDtypeStruct((B * H, W * Cout), jnp.float32),
        grid=(batch_blocks,),
        in_specs=[pl.BlockSpec((M, Cin), lambda i: (i, 0))]
                 + [full_spec(p) for p in kparams],
        out_specs=pl.BlockSpec((Bb * H, W * Cout), lambda i: (i, 0)),
        compiler_params=pltpu.CompilerParams(
            dimension_semantics=("parallel",)),
    )(x, *kparams)

    # lane-dense (B*H, W*Cout) -> NHWC -> NCHW
    out = out.reshape(B, H, W, Cout)
    return jnp.transpose(out, (0, 3, 1, 2))


# ------------------------- pure-JAX reference (glue) -------------------------
def ref_forward(x_nhwc, params):
    (w1, s1, b1, w2, s2, b2, w3, s3, b3, wd, sd, bd, wse1, wse2) = params
    B, H, W, _ = x_nhwc.shape
    hi = jax.lax.Precision.HIGHEST
    mm = lambda a, w: jnp.einsum('bhwc,cd->bhwd', a, w, precision=hi)

    h1 = jnp.maximum(mm(x_nhwc, w1) * s1[0] + b1[0], 0.0)
    xp = jnp.pad(h1, ((0, 0), (1, 1), (1, 1), (0, 0)))
    acc = jnp.zeros(h1.shape, jnp.float32)
    for dy in range(3):
        for dx in range(3):
            acc = acc + mm(xp[:, dy:dy + H, dx:dx + W, :], w2[dy, dx])
    h2 = jnp.maximum(acc * s2[0] + b2[0], 0.0)
    h3 = mm(h2, w3) * s3[0] + b3[0]
    idn = mm(x_nhwc, wd) * sd[0] + bd[0]
    y = jnp.mean(h3, axis=(1, 2))
    y = jnp.maximum(jnp.dot(y, wse1, precision=hi), 0.0)
    y = jax.nn.sigmoid(jnp.dot(y, wse2, precision=hi))
    out = h3 * y[:, None, None, :]
    return jnp.maximum(out + idn, 0.0)


def bn_fold(key, C):
    """Deterministic synthetic BatchNorm params folded to scale/bias (eval mode)."""
    k1, k2, k3, k4 = jax.random.split(key, 4)
    gamma = 1.0 + 0.1 * jax.random.normal(k1, (C,))
    beta = 0.1 * jax.random.normal(k2, (C,))
    mean = 0.1 * jax.random.normal(k3, (C,))
    var = 1.0 + 0.2 * jax.random.uniform(k4, (C,))
    scale = gamma / jnp.sqrt(var + 1e-5)
    bias = beta - mean * scale
    return (scale.reshape(1, C).astype(jnp.float32),
            bias.reshape(1, C).astype(jnp.float32))


if __name__ == "__main__":
    # small shapes consistent with the module (W*Cout = 128 -> lane-dense output):
    B, Cin, H, W = 2, 8, 8, 8
    cardinality, bottleneck_width = 4, 4
    GW = cardinality * bottleneck_width        # group_width = 16
    Cout = 16
    reduction = 4
    Cmid = Cout // reduction                   # SE hidden = 4
    bw = bottleneck_width

    key = jax.random.PRNGKey(0)
    keys = jax.random.split(key, 12)

    x = jax.random.normal(keys[0], (B, Cin, H, W), jnp.float32)

    # conv1 weight: torch (GW, Cin, 1, 1) -> kernel layout (Cin, GW)
    w1t = 0.2 * jax.random.normal(keys[1], (GW, Cin, 1, 1), jnp.float32)
    w1 = jnp.transpose(w1t[:, :, 0, 0], (1, 0))
    s1, b1 = bn_fold(keys[2], GW)

    # conv2 grouped weight: torch (GW, bw, 3, 3) -> block-diagonal dense (3,3,GW,GW)
    w2g = 0.2 * jax.random.normal(keys[3], (GW, bw, 3, 3), jnp.float32)
    w2 = jnp.zeros((3, 3, GW, GW), jnp.float32)
    for g in range(cardinality):
        blk = jnp.transpose(w2g[g * bw:(g + 1) * bw], (2, 3, 1, 0))    # (3,3,bw_in,bw_out)
        w2 = w2.at[:, :, g * bw:(g + 1) * bw, g * bw:(g + 1) * bw].set(blk)
    s2, b2 = bn_fold(keys[4], GW)

    # conv3 weight: torch (Cout, GW, 1, 1) -> (GW, Cout)
    w3t = 0.2 * jax.random.normal(keys[5], (Cout, GW, 1, 1), jnp.float32)
    w3 = jnp.transpose(w3t[:, :, 0, 0], (1, 0))
    s3, b3 = bn_fold(keys[6], Cout)

    # downsample (stride=1 but in_planes != out_planes): torch (Cout, Cin, 1, 1) -> (Cin, Cout)
    wdt = 0.2 * jax.random.normal(keys[7], (Cout, Cin, 1, 1), jnp.float32)
    wd = jnp.transpose(wdt[:, :, 0, 0], (1, 0))
    sd, bd = bn_fold(keys[8], Cout)

    # SE linears: torch fc1 (Cmid, Cout) -> (Cout, Cmid); fc2 (Cout, Cmid) -> (Cmid, Cout)
    wse1 = jnp.transpose(0.3 * jax.random.normal(keys[9], (Cmid, Cout), jnp.float32))
    wse2 = jnp.transpose(0.3 * jax.random.normal(keys[10], (Cout, Cmid), jnp.float32))

    params = (w1, s1, b1, w2, s2, b2, w3, s3, b3, wd, sd, bd, wse1, wse2)

    out = jax.block_until_ready(resnext_block_se(x, params))
    assert out.shape == (B, Cout, H, W)

    ref = ref_forward(jnp.transpose(x, (0, 2, 3, 1)), params)
    ref = jnp.transpose(ref, (0, 3, 1, 2))
    err = float(jnp.max(jnp.abs(out - ref)))
    # bf16 matmul operands (f32 accumulation) vs an all-f32 reference: observed
    # error is O(1e-2); any structural bug (wrong tap/mask/weight layout) would
    # be O(1e-1) or larger, so 6e-2 cleanly separates the two.
    assert err < 6e-2, f"max abs error {err}"

    print("KERNEL_OK")
</pallas_src>

<mosaic_0001>
module attributes {stable_mosaic.version = 11 : i64} {
  func.func @kernel(%arg0: memref<8x128xf32, #tpu.memory_space<vmem>>, %arg1: memref<8x128xf32, #tpu.memory_space<vmem>>) attributes {dimension_semantics = [], scalar_prefetch = 0 : i64, scratch_operands = 0 : i64, tpu.core_type = #tpu.core_type<tc>} {
    %c0 = arith.constant 0 : index
    %c0_0 = arith.constant 0 : index
    %0 = vector.load %arg0[%c0, %c0_0] : memref<8x128xf32, #tpu.memory_space<vmem>>, vector<8x128xf32>
    %c1_i32 = arith.constant 1 : i32
    %1 = tpu.dynamic_rotate %0 by %c1_i32 dim 0 : vector<8x128xf32>, i32 -> vector<8x128xf32>
    %c0_1 = arith.constant 0 : index
    %c0_2 = arith.constant 0 : index
    %2 = vector.load %arg1[%c0_1, %c0_2] : memref<8x128xf32, #tpu.memory_space<vmem>>, vector<8x128xf32>
    tpu.vector_store %arg1[%c0_1, %c0_2], %1 {strides = array<i32>} : memref<8x128xf32, #tpu.memory_space<vmem>>, vector<8x128xf32>,
    return
  }
}

</mosaic_0001>

<llo_original>
// kernel: tpu_custom_call.1
$region0: #{tpu_custom_call.1}
  #allocation0 [shape = 'u32[]', space=smem, size = 0x4, offset = 0x4, fixed_abs, tag = 'smem constant byte address 0x4 - core index']
  #allocation1 [shape = 'u32[144,128]{1,0:T(1,128)}', space=vmem, size = 0x12000, scoped, tag = 'internal scratch']
  %s0 = inlined_call_operand.hbm [shape: f32[8,128], index: 0, kind: input, shape index: {}]
  %s1 = inlined_call_operand.hbm [shape: f32[8,128], index: 1, kind: output, shape index: {}]
  %s2 = sld [smem:[#allocation0]]
  $region18: #{tpu_custom_call.1} parent=0
    _
  %s4 = ssub.s32 1, %s2
  %s5 = scalar_select 0, %s4, %s2
  $region1: #{tpu_custom_call.1} parent=0
    #allocation2 [shape = 'u8[4096]{0}', space=vmem, size = 0x1000, scoped, tag = 'input window, operand 0, single buffered']
    #allocation3 [shape = 's32[1]{0}', space=sflag, size = 0x4, scoped, tag = 'scoped memory for tpu_custom_call.1']
    #allocation4 [shape = 's32[1]{0}', space=sflag, size = 0x4, scoped, tag = 'scoped memory for tpu_custom_call.1']
    #allocation5 [shape = 'u8[4096]{0}', space=vmem, size = 0x1000, scoped, tag = 'output window, operand 0, single buffered']
    %6 = vsyncpa [#allocation3], 0
    %7 = vsyncpa [#allocation4], 0
    // Predicated region
    $region2: #{tpu_custom_call.1} parent=1 // pred_check
      _
    $region3: #{tpu_custom_call.1} parent=1 // pred_check_branch
      %9 = sbr.rel (0) target = $region5
    $region4: #{tpu_custom_call.1} parent=1 // pred_region
      %s11 = ssub.s32 128, 128
      %12 = vsyncadd [#allocation3], %s11
      %s14 = sshll.u32 [#allocation2], 4
      %s15 = int_to_ptr.vmem [resolvable:$true] %s14
      %17 = dma.hbm_to_vmem [thread:$0]  %s0, 128, %s15, [#allocation3]
    $region5: #{tpu_custom_call.1} parent=1 // pred_fallthru
      _
    // Predicated region
    $region6: #{tpu_custom_call.1} parent=1 // pred_check
      _
    $region7: #{tpu_custom_call.1} parent=1 // pred_check_branch
      %19 = sbr.rel (0) target = $region9
    $region8: #{tpu_custom_call.1} parent=1 // pred_region
      %20 = dma.done [#allocation3], 128
    $region9: #{tpu_custom_call.1} parent=1 // pred_fallthru
      _
    %v21 = vld [vmem:[#allocation2] sm:$0xff]
    %v22 = vrot.slane %v21, 7
    %23 = vst [vmem:[#allocation5] sm:$0xff] %v22
    // Predicated region
    $region10: #{tpu_custom_call.1} parent=1 // pred_check
      _
    $region11: #{tpu_custom_call.1} parent=1 // pred_check_branch
      %25 = sbr.rel (0) target = $region13
    $region12: #{tpu_custom_call.1} parent=1 // pred_region
      %s27 = ssub.s32 128, 128
      %28 = vsyncadd [#allocation4], %s27
      %s30 = sshll.u32 [#allocation5], 4
      %s31 = int_to_ptr.vmem [resolvable:$true] %s30
      %33 = dma.vmem_to_hbm [thread:$0]  %s31, 128, %s1, [#allocation4]
    $region13: #{tpu_custom_call.1} parent=1 // pred_fallthru
      _
    // Predicated region
    $region14: #{tpu_custom_call.1} parent=1 // pred_check
      _
    $region15: #{tpu_custom_call.1} parent=1 // pred_check_branch
      %35 = sbr.rel (0) target = $region17
    $region16: #{tpu_custom_call.1} parent=1 // pred_region
      %36 = dma.done [#allocation4], 128
    $region17: #{tpu_custom_call.1} parent=1 // pred_fallthru
      _
    %37 = vsyncpa [#allocation3], 1
    %38 = vsyncpa [#allocation4], 1

</llo_original>
